<compile_context>
chip_gen: v6e
topology: v6e:2x2x1
jax: 0.10.0
libtpu: 0.0.40
codegen_flags: <defaults>
</compile_context>

<pallas_src>
import functools
import math

import jax
import jax.numpy as jnp
from jax.experimental import pallas as pl
from jax.experimental.pallas import tpu as pltpu


ROW_TILE_TARGET = 256                      # rows per grid step (doc: >=256 nears HBM roofline)
VMEM_LIMIT = 48 * 1024 * 1024              # explicit scoped-VMEM limit (safe on v5e/v6e/v7x)


def _cparams(n_parallel_axes=1):
    return pltpu.CompilerParams(
        dimension_semantics=("parallel",) * n_parallel_axes,
        vmem_limit_bytes=VMEM_LIMIT,
    )


def _row_tile(m, target=ROW_TILE_TARGET):
    """Largest multiple-of-8 divisor of m that is <= target (falls back to full m)."""
    if m <= target:
        return m
    t = (target // 8) * 8
    while t >= 8:
        if m % t == 0:
            return t
        t -= 8
    return m


def _gelu(x):
    # exact (erf) GELU, matching torch.nn.GELU default used by HF AST
    return 0.5 * x * (1.0 + jax.lax.erf(x / jnp.sqrt(2.0).astype(x.dtype)))


def _layernorm_f32(x, g, b, eps):
    mu = jnp.mean(x, axis=-1, keepdims=True)
    var = jnp.mean(jnp.square(x - mu), axis=-1, keepdims=True)
    return (x - mu) * jax.lax.rsqrt(var + eps) * g + b


# ----------------------------- Pallas kernels -----------------------------

def _linear_kernel(x_ref, w_ref, b_ref, o_ref, *, activation):
    x = x_ref[...].astype(jnp.bfloat16)
    y = jnp.dot(x, w_ref[...], preferred_element_type=jnp.float32) + b_ref[...]
    if activation == "gelu":
        y = _gelu(y)
    elif activation == "relu":
        y = jnp.maximum(y, 0.0)
    o_ref[...] = y.astype(o_ref.dtype)


def pallas_linear(x, w, b, activation="none"):
    M, K = x.shape
    N = w.shape[1]
    tm = _row_tile(M)
    return pl.pallas_call(
        functools.partial(_linear_kernel, activation=activation),
        out_shape=jax.ShapeDtypeStruct((M, N), x.dtype),
        grid=(M // tm,),
        in_specs=[pl.BlockSpec((tm, K), lambda i: (i, 0)),
                  pl.BlockSpec((K, N), lambda i: (0, 0)),   # weight resident
                  pl.BlockSpec((1, N), lambda i: (0, 0))],
        out_specs=pl.BlockSpec((tm, N), lambda i: (i, 0)),
        compiler_params=_cparams(1),
    )(x, w, b.reshape(1, N))


def _ln_qkv_kernel(x_ref, g_ref, b_ref, w_ref, bias_ref, o_ref, *, eps):
    # fused: LayerNorm(before) + packed QKV projection
    x = x_ref[...].astype(jnp.float32)
    ln = _layernorm_f32(x, g_ref[...], b_ref[...], eps)
    y = jnp.dot(ln.astype(jnp.bfloat16), w_ref[...],
                preferred_element_type=jnp.float32) + bias_ref[...]
    o_ref[...] = y.astype(o_ref.dtype)


def pallas_ln_qkv(x, gamma, beta, w, bias, eps):
    M, D = x.shape
    N = w.shape[1]
    tm = _row_tile(M)
    return pl.pallas_call(
        functools.partial(_ln_qkv_kernel, eps=float(eps)),
        out_shape=jax.ShapeDtypeStruct((M, N), x.dtype),
        grid=(M // tm,),
        in_specs=[pl.BlockSpec((tm, D), lambda i: (i, 0)),
                  pl.BlockSpec((1, D), lambda i: (0, 0)),
                  pl.BlockSpec((1, D), lambda i: (0, 0)),
                  pl.BlockSpec((D, N), lambda i: (0, 0)),
                  pl.BlockSpec((1, N), lambda i: (0, 0))],
        out_specs=pl.BlockSpec((tm, N), lambda i: (i, 0)),
        compiler_params=_cparams(1),
    )(x, gamma.reshape(1, D), beta.reshape(1, D), w, bias.reshape(1, N))


def _attention_kernel(qkv_ref, o_ref, *, num_heads, scale):
    # one batch element per grid step; heads looped (unrolled) inside the kernel;
    # context written directly in (S, D) layout (lane-dense HBM writeback).
    qkv = qkv_ref[0].astype(jnp.float32)              # (S, 3D)
    d = qkv.shape[-1] // 3
    dh = d // num_heads
    for h in range(num_heads):
        q = (qkv[:, h * dh:(h + 1) * dh] * scale).astype(jnp.bfloat16)      # scale folded into Q
        k = qkv[:, d + h * dh:d + (h + 1) * dh].astype(jnp.bfloat16)
        v = qkv[:, 2 * d + h * dh:2 * d + (h + 1) * dh].astype(jnp.bfloat16)
        # contract the head dims directly (no materialized K^T)
        s = jax.lax.dot_general(q, k, (((1,), (1,)), ((), ())),
                                preferred_element_type=jnp.float32)          # (S, S)
        m = jnp.max(s, axis=-1, keepdims=True)
        p = jnp.exp(s - m)
        p = p * pl.reciprocal(jnp.sum(p, axis=-1, keepdims=True), approx=True)
        ctx = jnp.dot(p.astype(jnp.bfloat16), v, preferred_element_type=jnp.float32)
        o_ref[0, :, h * dh:(h + 1) * dh] = ctx.astype(o_ref.dtype)


def pallas_attention(qkv, num_heads, scale):
    B, S, D3 = qkv.shape
    D = D3 // 3
    return pl.pallas_call(
        functools.partial(_attention_kernel, num_heads=num_heads, scale=float(scale)),
        out_shape=jax.ShapeDtypeStruct((B, S, D), qkv.dtype),
        grid=(B,),
        in_specs=[pl.BlockSpec((1, S, D3), lambda b: (b, 0, 0))],
        out_specs=pl.BlockSpec((1, S, D), lambda b: (b, 0, 0)),
        compiler_params=_cparams(1),
    )(qkv)


def _attn_out_kernel(ctx_ref, w_ref, b_ref, res_ref, o_ref):
    # fused: output projection + residual add
    y = jnp.dot(ctx_ref[...].astype(jnp.bfloat16), w_ref[...],
                preferred_element_type=jnp.float32) + b_ref[...]
    o_ref[...] = (y + res_ref[...].astype(jnp.float32)).astype(o_ref.dtype)


def pallas_attn_out_residual(ctx, w, b, res):
    M, D = ctx.shape
    tm = _row_tile(M)
    return pl.pallas_call(
        _attn_out_kernel,
        out_shape=jax.ShapeDtypeStruct((M, D), res.dtype),
        grid=(M // tm,),
        in_specs=[pl.BlockSpec((tm, D), lambda i: (i, 0)),
                  pl.BlockSpec((D, D), lambda i: (0, 0)),
                  pl.BlockSpec((1, D), lambda i: (0, 0)),
                  pl.BlockSpec((tm, D), lambda i: (i, 0))],
        out_specs=pl.BlockSpec((tm, D), lambda i: (i, 0)),
        compiler_params=_cparams(1),
    )(ctx, w, b.reshape(1, D), res)


def _ffn_adapter_kernel(x_ref, g_ref, b_ref, wi_ref, bi_ref, wf_ref, bf_ref,
                        wd_ref, bd_ref, wu_ref, bu_ref, o_ref, *, eps, adapter_residual):
    # fused: LayerNorm(after) + intermediate(GELU) + output dense +
    #        Pfeiffer sequential bottleneck adapter (ReLU) + outer residual
    x = x_ref[...].astype(jnp.float32)
    ln = _layernorm_f32(x, g_ref[...], b_ref[...], eps)
    h = jnp.dot(ln.astype(jnp.bfloat16), wi_ref[...],
                preferred_element_type=jnp.float32) + bi_ref[...]
    h = _gelu(h)
    ffn = jnp.dot(h.astype(jnp.bfloat16), wf_ref[...],
                  preferred_element_type=jnp.float32) + bf_ref[...]
    ad = jnp.dot(ffn.astype(jnp.bfloat16), wd_ref[...],
                 preferred_element_type=jnp.float32) + bd_ref[...]
    ad = jnp.maximum(ad, 0.0)
    ad = jnp.dot(ad.astype(jnp.bfloat16), wu_ref[...],
                 preferred_element_type=jnp.float32) + bu_ref[...]
    y = ad + ffn if adapter_residual else ad
    o_ref[...] = (y + x).astype(o_ref.dtype)


def pallas_ffn_adapter(x, g, b, wi, bi, wf, bf, wd, bd, wu, bu, eps, adapter_residual):
    M, D = x.shape
    I = wi.shape[1]
    Db = wd.shape[1]
    tm = _row_tile(M)
    return pl.pallas_call(
        functools.partial(_ffn_adapter_kernel, eps=float(eps),
                          adapter_residual=bool(adapter_residual)),
        out_shape=jax.ShapeDtypeStruct((M, D), x.dtype),
        grid=(M // tm,),
        in_specs=[pl.BlockSpec((tm, D), lambda i: (i, 0)),
                  pl.BlockSpec((1, D), lambda i: (0, 0)),
                  pl.BlockSpec((1, D), lambda i: (0, 0)),
                  pl.BlockSpec((D, I), lambda i: (0, 0)),
                  pl.BlockSpec((1, I), lambda i: (0, 0)),
                  pl.BlockSpec((I, D), lambda i: (0, 0)),
                  pl.BlockSpec((1, D), lambda i: (0, 0)),
                  pl.BlockSpec((D, Db), lambda i: (0, 0)),
                  pl.BlockSpec((1, Db), lambda i: (0, 0)),
                  pl.BlockSpec((Db, D), lambda i: (0, 0)),
                  pl.BlockSpec((1, D), lambda i: (0, 0))],
        out_specs=pl.BlockSpec((tm, D), lambda i: (i, 0)),
        compiler_params=_cparams(1),
    )(x, g.reshape(1, D), b.reshape(1, D), wi, bi.reshape(1, I), wf, bf.reshape(1, D),
      wd, bd.reshape(1, Db), wu, bu.reshape(1, D))


def _layernorm_kernel(x_ref, g_ref, b_ref, o_ref, *, eps):
    x = x_ref[...].astype(jnp.float32)
    o_ref[...] = _layernorm_f32(x, g_ref[...], b_ref[...], eps).astype(o_ref.dtype)


def pallas_layernorm(x, gamma, beta, eps):
    M, D = x.shape
    tm = _row_tile(M)
    return pl.pallas_call(
        functools.partial(_layernorm_kernel, eps=float(eps)),
        out_shape=jax.ShapeDtypeStruct((M, D), x.dtype),
        grid=(M // tm,),
        in_specs=[pl.BlockSpec((tm, D), lambda i: (i, 0)),
                  pl.BlockSpec((1, D), lambda i: (0, 0)),
                  pl.BlockSpec((1, D), lambda i: (0, 0))],
        out_specs=pl.BlockSpec((tm, D), lambda i: (i, 0)),
        compiler_params=_cparams(1),
    )(x, gamma.reshape(1, D), beta.reshape(1, D))


# --------------------------- parameters / forward ---------------------------

class KeyGen:
    def __init__(self, seed):
        self.key = jax.random.PRNGKey(seed)

    def __call__(self):
        self.key, k = jax.random.split(self.key)
        return k


def init_params(cfg, kg):
    D, I = cfg["hidden"], cfg["intermediate"]
    Db = D // cfg["reduction_rate"]
    P = cfg["patch"] * cfg["patch"]
    L = cfg["num_layers"]
    nt = cfg["num_prompt_tokens"]

    def w(shape):  # matmul weights stored bf16 (halves HBM/VMEM traffic, MXU-friendly)
        return (jax.random.normal(kg(), shape, jnp.float32) * 0.02).astype(jnp.bfloat16)

    def wf32(shape):
        return jax.random.normal(kg(), shape, jnp.float32) * 0.02

    zeros = lambda s: jnp.zeros(s, jnp.float32)
    ones = lambda s: jnp.ones(s, jnp.float32)

    # VPT prompt init: uniform(-val, val), val = sqrt(6 / (3*patch*patch + hidden))
    val = math.sqrt(6.0 / float(3 * P + D))
    prompt = jax.random.uniform(kg(), (nt, D), jnp.float32, -val, val)
    deep = jax.random.uniform(kg(), (max(L - 1, 1), nt, D), jnp.float32, -val, val)

    params = {
        "patch_w": w((P, D)), "patch_b": zeros((D,)),
        "cls_token": wf32((D,)), "dist_token": wf32((D,)),
        "pos_emb": wf32((cfg["num_patches"] + 2, D)),
        "prompt_emb": prompt, "deep_prompt_emb": deep,
        "final_ln_g": ones((D,)), "final_ln_b": zeros((D,)),
        "head_w": w((D, cfg["num_classes"])), "head_b": zeros((cfg["num_classes"],)),
        "layers": [],
    }
    for _ in range(L):
        params["layers"].append({
            "ln1_g": ones((D,)), "ln1_b": zeros((D,)),
            "wqkv": w((D, 3 * D)), "bqkv": zeros((3 * D,)),   # fused Q|K|V projection
            "wo": w((D, D)), "bo": zeros((D,)),
            "ln2_g": ones((D,)), "ln2_b": zeros((D,)),
            "wi": w((D, I)), "bi": zeros((I,)),
            "wf": w((I, D)), "bf": zeros((D,)),
            "ad_wd": w((D, Db)), "ad_bd": zeros((Db,)),
            "ad_wu": w((Db, D)), "ad_bu": zeros((D,)),
        })
    return params


def ast_adapter_prompt_forward(x, params, cfg):
    B = x.shape[0]
    D, H = cfg["hidden"], cfg["num_heads"]
    Dh = D // H
    p, fs, ts = cfg["patch"], cfg["fstride"], cfg["tstride"]
    eps = cfg["eps"]
    nt = cfg["num_prompt_tokens"]

    # ---- ASTEmbeddings: (B,T,F) -> unsqueeze(1).transpose(2,3) -> NCHW (B,1,F,T) ----
    xin = jnp.transpose(x[:, None, :, :], (0, 1, 3, 2))
    # strided patch extraction without Python loops; projection matmul runs in Pallas.
    # TODO(synk): if loading pretrained HF Conv2d weights, ensure patch_w matches the
    #             (1, kh, kw) flatten order produced here.
    patches = jax.lax.conv_general_dilated_patches(
        xin, filter_shape=(p, p), window_strides=(fs, ts), padding="VALID")
    _, PP, fdim, tdim = patches.shape                       # (B, p*p, fdim, tdim)
    patches = jnp.transpose(patches, (0, 2, 3, 1)).reshape(B * fdim * tdim, PP)
    tok = pallas_linear(patches, params["patch_w"], params["patch_b"])
    tok = tok.reshape(B, fdim * tdim, D)

    cls = jnp.broadcast_to(params["cls_token"][None, None, :], (B, 1, D))
    dist = jnp.broadcast_to(params["dist_token"][None, None, :], (B, 1, D))
    emb = jnp.concatenate([cls, dist, tok], axis=1) + params["pos_emb"][None, :, :]

    # ---- incorporate_prompt: [CLS] + prompt tokens + patch tokens (drop dist token) ----
    prompt = jnp.broadcast_to(params["prompt_emb"][None], (B, nt, D))
    h = jnp.concatenate([emb[:, :1], prompt, emb[:, 2:]], axis=1)
    S = h.shape[1]
    scale = 1.0 / math.sqrt(Dh)

    # ---- encoder: pre-LN ViT blocks + Pfeiffer sequential FFN bottleneck adapter ----
    # TODO(synk): Houlsby MHSA adapter / 'conformer' adapter block / parallel
    #             (seq_or_par='parallel') adapter variants not implemented.
    for li, lp in enumerate(params["layers"]):
        if cfg["prompt_deep"] and li > 0:
            deep = jnp.broadcast_to(params["deep_prompt_emb"][li - 1][None], (B, nt, D))
            h = jnp.concatenate([h[:, :1], deep, h[:, 1 + nt:]], axis=1)
        x2d = h.reshape(B * S, D)
        qkv = pallas_ln_qkv(x2d, lp["ln1_g"], lp["ln1_b"], lp["wqkv"], lp["bqkv"], eps)
        ctx = pallas_attention(qkv.reshape(B, S, 3 * D), H, scale)          # (B, S, D)
        h1 = pallas_attn_out_residual(ctx.reshape(B * S, D), lp["wo"], lp["bo"], x2d)
        out = pallas_ffn_adapter(h1, lp["ln2_g"], lp["ln2_b"], lp["wi"], lp["bi"],
                                 lp["wf"], lp["bf"], lp["ad_wd"], lp["ad_bd"],
                                 lp["ad_wu"], lp["ad_bu"], eps, cfg["apply_residual"])
        h = out.reshape(B, S, D)

    # ---- final layernorm + pooling + classification head ----
    hs = pallas_layernorm(h.reshape(B * S, D),
                          params["final_ln_g"], params["final_ln_b"], eps).reshape(B, S, D)
    fo = cfg["final_output"]
    if fo == "CLS":
        pooled = hs[:, 0]
    elif fo == "ALL":
        pooled = jnp.mean(hs, axis=1)
    elif fo == "PROMPTS":
        pooled = jnp.mean(hs[:, 1:nt + 1], axis=1)
    elif fo == "SPEECH":
        pooled = jnp.mean(hs[:, 1 + nt:], axis=1)
    else:  # 'PROMPTS+SPEECH'
        pooled = jnp.mean(hs[:, 1:], axis=1)
    return pallas_linear(pooled, params["head_w"], params["head_b"])


# ----------------------------------- main -----------------------------------

if __name__ == "__main__":
    cfg = dict(
        hidden=32, intermediate=128, num_heads=4, num_layers=2,
        patch=8, fstride=4, tstride=4, max_length=96, num_mel_bins=32,
        num_prompt_tokens=6, prompt_deep=True,
        reduction_rate=4, apply_residual=True,
        num_classes=5, final_output="CLS", eps=1e-12,
    )
    fdim = (cfg["num_mel_bins"] - cfg["patch"]) // cfg["fstride"] + 1
    tdim = (cfg["max_length"] - cfg["patch"]) // cfg["tstride"] + 1
    cfg["num_patches"] = fdim * tdim   # 7 * 23 = 161 -> seq = 1 + 6 + 161 = 168

    kg = KeyGen(0)
    params = init_params(cfg, kg)

    x = jax.random.normal(jax.random.PRNGKey(0),
                          (2, cfg["max_length"], cfg["num_mel_bins"]), jnp.float32)

    logits = ast_adapter_prompt_forward(x, params, cfg)
    logits = jax.block_until_ready(logits)
    assert logits.shape == (2, cfg["num_classes"])
    assert bool(jnp.all(jnp.isfinite(logits)))
    print("KERNEL_OK")
</pallas_src>

<mosaic_0001>
module attributes {stable_mosaic.version = 11 : i64} {
  func.func @_linear_kernel(%arg0: i32, %arg1: memref<322x64xf32, #tpu.memory_space<vmem>>, %arg2: memref<64x32xbf16, #tpu.memory_space<vmem>>, %arg3: memref<1x32xf32, #tpu.memory_space<vmem>>, %arg4: memref<322x32xf32, #tpu.memory_space<vmem>>) attributes {dimension_semantics = [#tpu.dimension_semantics<parallel>], iteration_bounds = array<i64: 1>, scalar_prefetch = 0 : i64, scratch_operands = 0 : i64, tpu.core_type = #tpu.core_type<tc>, window_params = [{transform_indices = @transform_0, window_bounds = array<i64: 322, 64>}, {pipeline_mode = #tpu.pipeline_mode<synchronous>, transform_indices = @transform_1, window_bounds = array<i64: 64, 32>}, {pipeline_mode = #tpu.pipeline_mode<synchronous>, transform_indices = @transform_2, window_bounds = array<i64: 1, 32>}, {transform_indices = @transform_3, window_bounds = array<i64: 322, 32>}]} {
    %c0 = arith.constant 0 : index
    %c0_0 = arith.constant 0 : index
    %0 = vector.load %arg1[%c0, %c0_0] : memref<322x64xf32, #tpu.memory_space<vmem>>, vector<322x64xf32>
    %1 = arith.truncf %0 : vector<322x64xf32> to vector<322x64xbf16>
    %c0_1 = arith.constant 0 : index
    %c0_2 = arith.constant 0 : index
    %2 = vector.load %arg2[%c0_1, %c0_2] : memref<64x32xbf16, #tpu.memory_space<vmem>>, vector<64x32xbf16>
    %cst = arith.constant dense<0.000000e+00> : vector<322x32xf32>
    %3 = tpu.matmul %1, %2, %cst {dimension_numbers = #tpu.dot_dimension_numbers<[1], [0], [0], [1], [0, 0, 1, 1], [], []>} : vector<322x64xbf16>, vector<64x32xbf16>, vector<322x32xf32> -> vector<322x32xf32>
    %c0_3 = arith.constant 0 : index
    %c0_4 = arith.constant 0 : index
    %4 = vector.load %arg3[%c0_3, %c0_4] : memref<1x32xf32, #tpu.memory_space<vmem>>, vector<1x32xf32>
    %5 = vector.broadcast %4 : vector<1x32xf32> to vector<322x32xf32>
    %6 = arith.addf %3, %5 : vector<322x32xf32>
    %c0_5 = arith.constant 0 : index
    %c0_6 = arith.constant 0 : index
    %7 = vector.load %arg4[%c0_5, %c0_6] : memref<322x32xf32, #tpu.memory_space<vmem>>, vector<322x32xf32>
    tpu.vector_store %arg4[%c0_5, %c0_6], %6 {strides = array<i32>} : memref<322x32xf32, #tpu.memory_space<vmem>>, vector<322x32xf32>,
    return
  }
  func.func @transform_0(%arg0: i32) -> (i32, i32) {
    %c0_i32 = arith.constant 0 : i32
    %c0_i32_0 = arith.constant 0 : i32
    return %arg0, %c0_i32 : i32, i32
  }
  func.func @transform_1(%arg0: i32) -> (i32, i32) {
    %c0_i32 = arith.constant 0 : i32
    %c0_i32_0 = arith.constant 0 : i32
    %c0_i32_1 = arith.constant 0 : i32
    return %c0_i32, %c0_i32_0 : i32, i32
  }
  func.func @transform_2(%arg0: i32) -> (i32, i32) {
    %c0_i32 = arith.constant 0 : i32
    %c0_i32_0 = arith.constant 0 : i32
    %c0_i32_1 = arith.constant 0 : i32
    return %c0_i32, %c0_i32_0 : i32, i32
  }
  func.func @transform_3(%arg0: i32) -> (i32, i32) {
    %c0_i32 = arith.constant 0 : i32
    %c0_i32_0 = arith.constant 0 : i32
    return %arg0, %c0_i32 : i32, i32
  }
}

</mosaic_0001>

<llo_original>
// kernel: tpu_custom_call.1
$region0: #{tpu_custom_call.1}
  #allocation0 [shape = 'u32[]', space=smem, size = 0x4, offset = 0x4, fixed_abs, tag = 'smem constant byte address 0x4 - core index']
  #allocation1 [shape = 'u32[144,128]{1,0:T(1,128)}', space=vmem, size = 0x12000, scoped, tag = 'internal scratch']
  %s0 = inlined_call_operand.vmem [shape: f32[322,64], index: 0, kind: input, shape index: {}]
  %s1 = inlined_call_operand.vmem [shape: bf16[64,32], index: 1, kind: input, shape index: {}]
  %s2 = inlined_call_operand.vmem [shape: f32[1,32], index: 2, kind: input, shape index: {}]
  %s3 = inlined_call_operand.vmem [shape: f32[322,32], index: 3, kind: output, shape index: {}]
  %s4 = sld [smem:[#allocation0]]
  $region22: #{tpu_custom_call.1} parent=0
    _
  %s6 = ssub.s32 1, %s4
  %s7 = scalar_select 0, %s6, %s4
  // Predicated region
  $region2: #{tpu_custom_call.1} parent=0 // pred_check
    _
  $region3: #{tpu_custom_call.1} parent=0 // pred_check_branch
    %9 = sbr.rel (0) target = $region5
  $region4: #{tpu_custom_call.1} parent=0 // pred_region
    _
  $region5: #{tpu_custom_call.1} parent=0 // pred_fallthru
    _
  // Predicated region
  $region6: #{tpu_custom_call.1} parent=0 // pred_check
    _
  $region7: #{tpu_custom_call.1} parent=0 // pred_check_branch
    %11 = sbr.rel (0) target = $region9
  $region8: #{tpu_custom_call.1} parent=0 // pred_region
    _
  $region9: #{tpu_custom_call.1} parent=0 // pred_fallthru
    _
  // Predicated region
  $region10: #{tpu_custom_call.1} parent=0 // pred_check
    _
  $region11: #{tpu_custom_call.1} parent=0 // pred_check_branch
    %13 = sbr.rel (0) target = $region13
  $region12: #{tpu_custom_call.1} parent=0 // pred_region
    _
  $region13: #{tpu_custom_call.1} parent=0 // pred_fallthru
    _
  %v15 = vld [vmem:[%s0] sm:$0xff]
  %v16 = vld [vmem:[%s0 + $0x8] sm:$0xff]
  %v17 = vld [vmem:[%s0 + $0x10] sm:$0xff]
  %v18 = vld [vmem:[%s0 + $0x18] sm:$0xff]
  %v19 = vld [vmem:[%s0 + $0x20] sm:$0xff]
  %v20 = vld [vmem:[%s0 + $0x28] sm:$0xff]
  %v21 = vld [vmem:[%s0 + $0x30] sm:$0xff]
  %v22 = vld [vmem:[%s0 + $0x38] sm:$0xff]
  %v23 = vld [vmem:[%s0 + $0x40] sm:$0xff]
  %v24 = vld [vmem:[%s0 + $0x48] sm:$0xff]
  %v25 = vld [vmem:[%s0 + $0x50] sm:$0xff]
  %v26 = vld [vmem:[%s0 + $0x58] sm:$0xff]
  %v27 = vld [vmem:[%s0 + $0x60] sm:$0xff]
  %v28 = vld [vmem:[%s0 + $0x68] sm:$0xff]
  %v29 = vld [vmem:[%s0 + $0x70] sm:$0xff]
  %v30 = vld [vmem:[%s0 + $0x78] sm:$0xff]
  %v31 = vld [vmem:[%s0 + $0x80] sm:$0xff]
  %v32 = vld [vmem:[%s0 + $0x88] sm:$0xff]
  %v33 = vld [vmem:[%s0 + $0x90] sm:$0xff]
  %v34 = vld [vmem:[%s0 + $0x98] sm:$0xff]
  %v35 = vld [vmem:[%s0 + $0xa0] sm:$0xff]
  %v36 = vld [vmem:[%s0 + $0xa8] sm:$0xff]
  %v37 = vld [vmem:[%s0 + $0xb0] sm:$0xff]
  %v38 = vld [vmem:[%s0 + $0xb8] sm:$0xff]
  %v39 = vld [vmem:[%s0 + $0xc0] sm:$0xff]
  %v40 = vld [vmem:[%s0 + $0xc8] sm:$0xff]
  %v41 = vld [vmem:[%s0 + $0xd0] sm:$0xff]
  %v42 = vld [vmem:[%s0 + $0xd8] sm:$0xff]
  %v43 = vld [vmem:[%s0 + $0xe0] sm:$0xff]
  %v44 = vld [vmem:[%s0 + $0xe8] sm:$0xff]
  %v45 = vld [vmem:[%s0 + $0xf0] sm:$0xff]
  %v46 = vld [vmem:[%s0 + $0xf8] sm:$0xff]
  %v47 = vld [vmem:[%s0 + $0x100] sm:$0xff]
  %v48 = vld [vmem:[%s0 + $0x108] sm:$0xff]
  %v49 = vld [vmem:[%s0 + $0x110] sm:$0xff]
  %v50 = vld [vmem:[%s0 + $0x118] sm:$0xff]
  %v51 = vld [vmem:[%s0 + $0x120] sm:$0xff]
  %v52 = vld [vmem:[%s0 + $0x128] sm:$0xff]
  %v53 = vld [vmem:[%s0 + $0x130] sm:$0xff]
  %v54 = vld [vmem:[%s0 + $0x138] sm:$0xff]
  %v55 = vld [vmem:[%s0 + $0x140] sm:$0x3]
  %v56 = vpack.c.bf16 %v16, %v15
  %v57 = vpack.c.bf16 %v18, %v17
  %v58 = vpack.c.bf16 %v20, %v19
  %v59 = vpack.c.bf16 %v22, %v21
  %v60 = vpack.c.bf16 %v24, %v23
  %v61 = vpack.c.bf16 %v26, %v25
  %v62 = vpack.c.bf16 %v28, %v27
  %v63 = vpack.c.bf16 %v30, %v29
  %v64 = vpack.c.bf16 %v32, %v31
  %v65 = vpack.c.bf16 %v34, %v33
  %v66 = vpack.c.bf16 %v36, %v35
  %v67 = vpack.c.bf16 %v38, %v37
  %v68 = vpack.c.bf16 %v40, %v39
  %v69 = vpack.c.bf16 %v42, %v41
  %v70 = vpack.c.bf16 %v44, %v43
  %v71 = vpack.c.bf16 %v46, %v45
  %v72 = vpack.c.bf16 %v48, %v47
  %v73 = vpack.c.bf16 %v50, %v49
  %v74 = vpack.c.bf16 %v52, %v51
  %v75 = vpack.c.bf16 %v54, %v53
  %v76 = vpack.c.bf16 %v55, %v55
  %v77 = vld [vmem:[%s1] sm:$0xf]
  %v78 = vld [vmem:[%s1 + $0x4] sm:$0xf]
  %v79 = vld [vmem:[%s1 + $0x8] sm:$0xf]
  %v80 = vld [vmem:[%s1 + $0xc] sm:$0xf]
  %v81 = vld [vmem:[%s1 + $0x10] sm:$0xf]
  %v82 = vld [vmem:[%s1 + $0x14] sm:$0xf]
  %v83 = vld [vmem:[%s1 + $0x18] sm:$0xf]
  %v84 = vld [vmem:[%s1 + $0x1c] sm:$0xf]
  %v85 = vld [vmem:[%s2] sm:$0x1]
  %v87 = vlaneseq
  %v88 = vshrl.u32 %v87, 7
  %v89 = vsub.s32 0, %v88
  %v90 = vrot.slane %v85, %v89
  %v100 = vunpack.c.l.b16 %v77
  %v101 = vunpack.c.l.b16 %v78
  %v102 = vunpack.c.l.b16 %v79
  %v103 = vunpack.c.l.b16 %v80
  %v104 = vunpack.c.l.b16 %v81
  %v105 = vunpack.c.l.b16 %v82
  %v106 = vunpack.c.l.b16 %v83
  %v107 = vunpack.c.l.b16 %v84
  %v108 = vpack.c.b16 %v101, %v100
  %v109 = vpack.c.b16 %v103, %v102
  %v110 = vpack.c.b16 %v105, %v104
  %v111 = vpack.c.b16 %v107, %v106
  %vm116 = vcmask 523264
  %v118 = vsel %vm116, %v56, 0
  %v121 = vsel %vm116, %v57, 0
  %v124 = vsel %vm116, %v58, 0
  %v127 = vsel %vm116, %v59, 0
  %v130 = vsel %vm116, %v60, 0
  %v133 = vsel %vm116, %v61, 0
  %v136 = vsel %vm116, %v62, 0
  %v139 = vsel %vm116, %v63, 0
  %v142 = vsel %vm116, %v64, 0
  %v145 = vsel %vm116, %v65, 0
  %v148 = vsel %vm116, %v66, 0
  %v151 = vsel %vm116, %v67, 0
  %v154 = vsel %vm116, %v68, 0
  %v157 = vsel %vm116, %v69, 0
  %v160 = vsel %vm116, %v70, 0
  %v163 = vsel %vm116, %v71, 0
  %v166 = vsel %vm116, %v72, 0
  %v169 = vsel %vm116, %v73, 0
  %v172 = vsel %vm116, %v74, 0
  %v175 = vsel %vm116, %v75, 0
  %v178 = vsel %vm116, %v76, 0
  %180 = vmatprep.subr.bf16.mxu0 0
  %181 = vmatpush1.bf16.msra.mxu0 0
  %182 = vmatprep.subr.bf16.mxu0 0
  %183 = vmatpush1.bf16.msra.mxu0 0
  %184 = vmatprep.subr.bf16.mxu0 0
  %185 = vmatpush1.bf16.msra.mxu0 0
  %186 = vmatprep.subr.bf16.mxu0 0
  %187 = vmatpush1.bf16.msra.mxu0 0
  %188 = vmatprep.subr.bf16.mxu0 0
  %189 = vmatpush1.bf16.msra.mxu0 %v111
  %190 = vmatprep.subr.bf16.mxu0 0
  %191 = vmatpush1.bf16.msra.mxu0 %v110
  %192 = vmatprep.subr.bf16.mxu0 0
  %193 = vmatpush1.bf16.msra.mxu0 %v109
  %194 = vmatprep.subr.bf16.mxu0 0
  %195 = vmatpush1.bf16.msra.mxu0 %v108
  %196 = vmatprep.subr.bf16.mxu0 0
  %197 = vmatpush2.bf16.msra.mxu0 0
  %198 = vmatprep.subr.bf16.mxu0 0
  %199 = vmatpush2.bf16.msra.mxu0 0
  %200 = vmatprep.subr.bf16.mxu0 0
  %201 = vmatpush2.bf16.msra.mxu0 0
  %202 = vmatprep.subr.bf16.mxu0 0
  %203 = vmatpush2.bf16.msra.mxu0 0
  %204 = vmatprep.subr.bf16.mxu0 0
  %205 = vmatpush2.bf16.msra.mxu0 0
  %206 = vmatprep.subr.bf16.mxu0 0
  %207 = vmatpush2.bf16.msra.mxu0 0
  %208 = vmatprep.subr.bf16.mxu0 0
  %209 = vmatpush2.bf16.msra.mxu0 0
  %210 = vmatprep.subr.bf16.mxu0 0
  %211 = vmatpush2.bf16.msra.mxu0 0
  %212 = vmatprep.mubr.bf16.mxu0 0
  %213 = vmatmul.mubr.bf16.gmra.mxu0 %v118
  %v214 = vpop.f32.mrf.mxu0
  %v215 = vadd.f32 %v90, %v214
  %v216 = vpop.f32.mrf.mxu0
  %v217 = vpop.f32.mrf.mxu0
  %v218 = vadd.f32 %v90, %v217
  %v219 = vpop.f32.mrf.mxu0
  %220 = vmatprep.mubr.bf16.mxu0 0
  %221 = vmatmul.mubr.bf16.gmra.mxu0 %v121
  %v222 = vpop.f32.mrf.mxu0
  %v223 = vadd.f32 %v90, %v222
  %v224 = vpop.f32.mrf.mxu0
  %v225 = vpop.f32.mrf.mxu0
  %v226 = vadd.f32 %v90, %v225
  %v227 = vpop.f32.mrf.mxu0
  %228 = vmatprep.mubr.bf16.mxu0 0
  %229 = vmatmul.mubr.bf16.gmra.mxu0 %v124
  %v230 = vpop.f32.mrf.mxu0
  %v231 = vadd.f32 %v90, %v230
  %v232 = vpop.f32.mrf.mxu0
  %v233 = vpop.f32.mrf.mxu0
  %v234 = vadd.f32 %v90, %v233
  %v235 = vpop.f32.mrf.mxu0
  %236 = vmatprep.mubr.bf16.mxu0 0
  %237 = vmatmul.mubr.bf16.gmra.mxu0 %v127
  %v238 = vpop.f32.mrf.mxu0
  %v239 = vadd.f32 %v90, %v238
  %v240 = vpop.f32.mrf.mxu0
  %v241 = vpop.f32.mrf.mxu0
  %v242 = vadd.f32 %v90, %v241
  %v243 = vpop.f32.mrf.mxu0
  %244 = vmatprep.mubr.bf16.mxu0 0
  %245 = vmatmul.mubr.bf16.gmra.mxu0 %v130
  %v246 = vpop.f32.mrf.mxu0
  %v247 = vadd.f32 %v90, %v246
  %v248 = vpop.f32.mrf.mxu0
  %v249 = vpop.f32.mrf.mxu0
  %v250 = vadd.f32 %v90, %v249
  %v251 = vpop.f32.mrf.mxu0
  %252 = vmatprep.mubr.bf16.mxu0 0
  %253 = vmatmul.mubr.bf16.gmra.mxu0 %v133
  %v254 = vpop.f32.mrf.mxu0
  %v255 = vadd.f32 %v90, %v254
  %v256 = vpop.f32.mrf.mxu0
  %v257 = vpop.f32.mrf.mxu0
  %v258 = vadd.f32 %v90, %v257
  %v259 = vpop.f32.mrf.mxu0
  %260 = vmatprep.mubr.bf16.mxu0 0
  %261 = vmatmul.mubr.bf16.gmra.mxu0 %v136
  %v262 = vpop.f32.mrf.mxu0
  %v263 = vadd.f32 %v90, %v262
  %v264 = vpop.f32.mrf.mxu0
  %v265 = vpop.f32.mrf.mxu0
  %v266 = vadd.f32 %v90, %v265
  %v267 = vpop.f32.mrf.mxu0
  %268 = vmatprep.mubr.bf16.mxu0 0
  %269 = vmatmul.mubr.bf16.gmra.mxu0 %v139
  %v270 = vpop.f32.mrf.mxu0
  %v271 = vadd.f32 %v90, %v270
  %v272 = vpop.f32.mrf.mxu0
  %v273 = vpop.f32.mrf.mxu0
  %v274 = vadd.f32 %v90, %v273
  %v275 = vpop.f32.mrf.mxu0
  %276 = vmatprep.mubr.bf16.mxu0 0
  %277 = vmatmul.mubr.bf16.gmra.mxu0 %v142
  %v278 = vpop.f32.mrf.mxu0
  %v279 = vadd.f32 %v90, %v278
  %v280 = vpop.f32.mrf.mxu0
  %v281 = vpop.f32.mrf.mxu0
  %v282 = vadd.f32 %v90, %v281
  %v283 = vpop.f32.mrf.mxu0
  %284 = vmatprep.mubr.bf16.mxu0 0
  %285 = vmatmul.mubr.bf16.gmra.mxu0 %v145
  %v286 = vpop.f32.mrf.mxu0
  %v287 = vadd.f32 %v90, %v286
  %v288 = vpop.f32.mrf.mxu0
  %v289 = vpop.f32.mrf.mxu0
  %v290 = vadd.f32 %v90, %v289
  %v291 = vpop.f32.mrf.mxu0
  %292 = vmatprep.mubr.bf16.mxu0 0
  %293 = vmatmul.mubr.bf16.gmra.mxu0 %v148
  %v294 = vpop.f32.mrf.mxu0
  %v295 = vadd.f32 %v90, %v294
  %v296 = vpop.f32.mrf.mxu0
  %v297 = vpop.f32.mrf.mxu0
  %v298 = vadd.f32 %v90, %v297
  %v299 = vpop.f32.mrf.mxu0
  %300 = vmatprep.mubr.bf16.mxu0 0
  %301 = vmatmul.mubr.bf16.gmra.mxu0 %v151
  %v302 = vpop.f32.mrf.mxu0
  %v303 = vadd.f32 %v90, %v302
  %v304 = vpop.f32.mrf.mxu0
  %v305 = vpop.f32.mrf.mxu0
  %v306 = vadd.f32 %v90, %v305
  %v307 = vpop.f32.mrf.mxu0
  %308 = vmatprep.mubr.bf16.mxu0 0
  %309 = vmatmul.mubr.bf16.gmra.mxu0 %v154
  %v310 = vpop.f32.mrf.mxu0
  %v311 = vadd.f32 %v90, %v310
  %v312 = vpop.f32.mrf.mxu0
  %v313 = vpop.f32.mrf.mxu0
  %v314 = vadd.f32 %v90, %v313
  %v315 = vpop.f32.mrf.mxu0
  %316 = vmatprep.mubr.bf16.mxu0 0
  %317 = vmatmul.mubr.bf16.gmra.mxu0 %v157
  %v318 = vpop.f32.mrf.mxu0
  %v319 = vadd.f32 %v90, %v318
  %v320 = vpop.f32.mrf.mxu0
  %v321 = vpop.f32.mrf.mxu0
  %v322 = vadd.f32 %v90, %v321
  %v323 = vpop.f32.mrf.mxu0
  %324 = vmatprep.mubr.bf16.mxu0 0
  %325 = vmatmul.mubr.bf16.gmra.mxu0 %v160
  %v326 = vpop.f32.mrf.mxu0
  %v327 = vadd.f32 %v90, %v326
  %v328 = vpop.f32.mrf.mxu0
  %v329 = vpop.f32.mrf.mxu0
  %v330 = vadd.f32 %v90, %v329
  %v331 = vpop.f32.mrf.mxu0
  %332 = vmatprep.mubr.bf16.mxu0 0
  %333 = vmatmul.mubr.bf16.gmra.mxu0 %v163
  %v334 = vpop.f32.mrf.mxu0
  %v335 = vadd.f32 %v90, %v334
  %v336 = vpop.f32.mrf.mxu0
  %v337 = vpop.f32.mrf.mxu0
  %v338 = vadd.f32 %v90, %v337
  %v339 = vpop.f32.mrf.mxu0
  %340 = vmatprep.mubr.bf16.mxu0 0
  %341 = vmatmul.mubr.bf16.gmra.mxu0 %v166
  %v342 = vpop.f32.mrf.mxu0
  %v343 = vadd.f32 %v90, %v342
  %v344 = vpop.f32.mrf.mxu0
  %v345 = vpop.f32.mrf.mxu0
  %v346 = vadd.f32 %v90, %v345
  %v347 = vpop.f32.mrf.mxu0
  %348 = vmatprep.mubr.bf16.mxu0 0
  %349 = vmatmul.mubr.bf16.gmra.mxu0 %v169
  %v350 = vpop.f32.mrf.mxu0
  %v351 = vadd.f32 %v90, %v350
  %v352 = vpop.f32.mrf.mxu0
  %v353 = vpop.f32.mrf.mxu0
  %v354 = vadd.f32 %v90, %v353
  %v355 = vpop.f32.mrf.mxu0
  %356 = vmatprep.mubr.bf16.mxu0 0
  %357 = vmatmul.mubr.bf16.gmra.mxu0 %v172
  %v358 = vpop.f32.mrf.mxu0
  %v359 = vadd.f32 %v90, %v358
  %v360 = vpop.f32.mrf.mxu0
  %v361 = vpop.f32.mrf.mxu0
  %v362 = vadd.f32 %v90, %v361
  %v363 = vpop.f32.mrf.mxu0
  %364 = vmatprep.mubr.bf16.mxu0 0
  %365 = vmatmul.mubr.bf16.gmra.mxu0 %v175
  %v366 = vpop.f32.mrf.mxu0
  %v367 = vadd.f32 %v90, %v366
  %v368 = vpop.f32.mrf.mxu0
  %v369 = vpop.f32.mrf.mxu0
  %v370 = vadd.f32 %v90, %v369
  %v371 = vpop.f32.mrf.mxu0
  %372 = vmatprep.mubr.bf16.mxu0 0
  %373 = vmatmul.mubr.bf16.gmra.mxu0 %v178
  %v374 = vpop.f32.mrf.mxu0
  %v375 = vadd.f32 %v90, %v374
  %v376 = vpop.f32.mrf.mxu0
  %v377 = vpop.f32.mrf.mxu0
  %v378 = vpop.f32.mrf.mxu0
  %379 = vdwg.mxu0
  %vm380 = vcmask 261120
  %381 = vst.msk [vmem:[%s3] sm:$0xff] %vm380, %v215
  %382 = vst.msk [vmem:[%s3 + $0x8] sm:$0xff] %vm380, %v218
  %383 = vst.msk [vmem:[%s3 + $0x10] sm:$0xff] %vm380, %v223
  %384 = vst.msk [vmem:[%s3 + $0x18] sm:$0xff] %vm380, %v226
  %385 = vst.msk [vmem:[%s3 + $0x20] sm:$0xff] %vm380, %v231
  %386 = vst.msk [vmem:[%s3 + $0x28] sm:$0xff] %vm380, %v234
  %387 = vst.msk [vmem:[%s3 + $0x30] sm:$0xff] %vm380, %v239
  %388 = vst.msk [vmem:[%s3 + $0x38] sm:$0xff] %vm380, %v242
  %389 = vst.msk [vmem:[%s3 + $0x40] sm:$0xff] %vm380, %v247
  %390 = vst.msk [vmem:[%s3 + $0x48] sm:$0xff] %vm380, %v250
  %391 = vst.msk [vmem:[%s3 + $0x50] sm:$0xff] %vm380, %v255
  %392 = vst.msk [vmem:[%s3 + $0x58] sm:$0xff] %vm380, %v258
  %393 = vst.msk [vmem:[%s3 + $0x60] sm:$0xff] %vm380, %v263
  %394 = vst.msk [vmem:[%s3 + $0x68] sm:$0xff] %vm380, %v266
  %395 = vst.msk [vmem:[%s3 + $0x70] sm:$0xff] %vm380, %v271
  %396 = vst.msk [vmem:[%s3 + $0x78] sm:$0xff] %vm380, %v274
  %397 = vst.msk [vmem:[%s3 + $0x80] sm:$0xff] %vm380, %v279
  %398 = vst.msk [vmem:[%s3 + $0x88] sm:$0xff] %vm380, %v282
  %399 = vst.msk [vmem:[%s3 + $0x90] sm:$0xff] %vm380, %v287
  %400 = vst.msk [vmem:[%s3 + $0x98] sm:$0xff] %vm380, %v290
  %401 = vst.msk [vmem:[%s3 + $0xa0] sm:$0xff] %vm380, %v295
  %402 = vst.msk [vmem:[%s3 + $0xa8] sm:$0xff] %vm380, %v298
  %403 = vst.msk [vmem:[%s3 + $0xb0] sm:$0xff] %vm380, %v303
  %404 = vst.msk [vmem:[%s3 + $0xb8] sm:$0xff] %vm380, %v306
  %405 = vst.msk [vmem:[%s3 + $0xc0] sm:$0xff] %vm380, %v311
  %406 = vst.msk [vmem:[%s3 + $0xc8] sm:$0xff] %vm380, %v314
  %407 = vst.msk [vmem:[%s3 + $0xd0] sm:$0xff] %vm380, %v319
  %408 = vst.msk [vmem:[%s3 + $0xd8] sm:$0xff] %vm380, %v322
  %409 = vst.msk [vmem:[%s3 + $0xe0] sm:$0xff] %vm380, %v327
  %410 = vst.msk [vmem:[%s3 + $0xe8] sm:$0xff] %vm380, %v330
  %411 = vst.msk [vmem:[%s3 + $0xf0] sm:$0xff] %vm380, %v335
  %412 = vst.msk [vmem:[%s3 + $0xf8] sm:$0xff] %vm380, %v338
  %413 = vst.msk [vmem:[%s3 + $0x100] sm:$0xff] %vm380, %v343
  %414 = vst.msk [vmem:[%s3 + $0x108] sm:$0xff] %vm380, %v346
  %415 = vst.msk [vmem:[%s3 + $0x110] sm:$0xff] %vm380, %v351
  %416 = vst.msk [vmem:[%s3 + $0x118] sm:$0xff] %vm380, %v354
  %417 = vst.msk [vmem:[%s3 + $0x120] sm:$0xff] %vm380, %v359
  %418 = vst.msk [vmem:[%s3 + $0x128] sm:$0xff] %vm380, %v362
  %419 = vst.msk [vmem:[%s3 + $0x130] sm:$0xff] %vm380, %v367
  %420 = vst.msk [vmem:[%s3 + $0x138] sm:$0xff] %vm380, %v370
  %vm421 = vcmask 254976
  %422 = vst.msk [vmem:[%s3 + $0x140] sm:$0x3] %vm421, %v375
  // Predicated region
  $region14: #{tpu_custom_call.1} parent=0 // pred_check
    _
  $region15: #{tpu_custom_call.1} parent=0 // pred_check_branch
    %424 = sbr.rel (0) target = $region17
  $region16: #{tpu_custom_call.1} parent=0 // pred_region
    _
  $region17: #{tpu_custom_call.1} parent=0 // pred_fallthru
    _
  // Predicated region
  $region18: #{tpu_custom_call.1} parent=0 // pred_check
    _
  $region19: #{tpu_custom_call.1} parent=0 // pred_check_branch
    %426 = sbr.rel (0) target = $region21
  $region20: #{tpu_custom_call.1} parent=0 // pred_region
    _
  $region21: #{tpu_custom_call.1} parent=0 // pred_fallthru
    _

</llo_original>
